<compile_context>
chip_gen: v7x
topology: tpu7x:2x2x1
jax: 0.10.0
libtpu: 0.0.40
codegen_flags: <defaults>
</compile_context>

<pallas_src>
import functools

import jax
import jax.numpy as jnp
from jax.experimental import pallas as pl
from jax.experimental.pallas import tpu as pltpu


def _attention_gate_kernel(
    g_ref,        # (NB, F_g, TP)   gate features, pixels on lanes
    x_ref,        # (NB, F_l, TP)   skip features, pixels on lanes
    wg_ref,       # (F_int, F_g)    BN-scale-folded W_g conv weight (f32)
    wx_ref,       # (F_int, F_l)    BN-scale-folded W_x conv weight (f32)
    wpsi_ref,     # (F_int, 1)      BN-scale-folded psi conv weight (column)
    shift_ref,    # (F_int, 1)      combined g-branch + x-branch BN shift
    p_shift_ref,  # (1, 1)          psi-branch BN shift
    out_ref,      # (NB, F_l, TP)
):
    nb = g_ref.shape[0]
    wg = wg_ref[...]
    wx = wx_ref[...]
    wpsi = wpsi_ref[...]
    shift = shift_ref[...]
    p_shift = p_shift_ref[...]

    # Short static loop over the images blocked into this grid step (NB is
    # small; at large resolutions NB == 1).  All math in f32 on the MXU/VPU
    # regardless of the (possibly bf16) I/O dtype.
    for b in range(nb):
        g_b = g_ref[b].astype(jnp.float32)   # (F_g, TP)
        x_b = x_ref[b]                       # (F_l, TP), io dtype

        # g1 + x1 = (scale_g*W_g) @ g + (scale_x*W_x) @ x + (shift_g+shift_x)
        g1 = jnp.dot(wg, g_b, preferred_element_type=jnp.float32)
        x1 = jnp.dot(wx, x_b.astype(jnp.float32),
                     preferred_element_type=jnp.float32)
        h = jnp.maximum(g1 + x1 + shift, 0.0)                 # (F_int, TP)

        # psi pre-activation: fused multiply + cross-sublane reduce instead
        # of an MXU matmul with a single output column.
        p = jnp.sum(h * wpsi, axis=0, keepdims=True)          # (1, TP)
        p = jax.nn.sigmoid(p + p_shift)                       # (1, TP)

        # out = x * psi, psi broadcast over the channel (sublane) dim.
        out_ref[b] = (x_b.astype(jnp.float32) * p).astype(out_ref.dtype)


def _round_up(v, m):
    return ((v + m - 1) // m) * m


def _choose_pixel_tile(P, tile_p):
    """Return (TP, P_pad): TP a multiple of 128, P_pad a multiple of TP >= P."""
    tile_p = max(128, (tile_p // 128) * 128)
    p128 = _round_up(P, 128)
    if p128 <= tile_p:
        return p128, p128
    n_tiles = -(-p128 // tile_p)                    # ceil
    tp = _round_up(-(-p128 // n_tiles), 128)
    return tp, n_tiles * tp


def _choose_batch_block(N, per_image_bytes, n_ptiles, target_bytes=4 << 20):
    """Block NB images per grid step so each step moves ~target_bytes."""
    divisors = [d for d in range(1, N + 1) if N % d == 0]
    nb = 1
    for d in divisors:
        if d * per_image_bytes <= target_bytes:
            nb = d
    # Keep >= 2 grid steps when possible so megacore (v7x) has work to shard.
    while nb > 1 and (N // nb) * n_ptiles < 2:
        smaller = [d for d in divisors if d < nb]
        if not smaller:
            break
        nb = smaller[-1]
    return nb


def attention_gate(g, x, params, *, tile_p=32768, io_dtype=None, eps=1e-5):
    """g: (N, F_g, H, W), x: (N, F_l, H, W)  ->  (N, F_l, H, W)."""
    N, F_g, H, W = g.shape
    _, F_l, _, _ = x.shape
    P = H * W

    wg = params["wg"]          # (F_int, F_g)
    wx = params["wx"]          # (F_int, F_l)
    wpsi = params["wpsi"]      # (1, F_int)
    F_int = wg.shape[0]

    # Fold conv bias + eval-mode BatchNorm into per-channel scale/shift.
    def fold_bn(bias, gamma, beta, mean, var):
        scale = gamma / jnp.sqrt(var + eps)
        shift = beta + scale * (bias - mean)
        return scale, shift

    g_scale, g_shift = fold_bn(params["bg"], params["bn_g_gamma"],
                               params["bn_g_beta"], params["bn_g_mean"],
                               params["bn_g_var"])
    x_scale, x_shift = fold_bn(params["bx"], params["bn_x_gamma"],
                               params["bn_x_beta"], params["bn_x_mean"],
                               params["bn_x_var"])
    p_scale, p_shift = fold_bn(params["bpsi"], params["bn_p_gamma"],
                               params["bn_p_beta"], params["bn_p_mean"],
                               params["bn_p_var"])

    # Fold BN scales into the weights; merge the two branch shifts. Weights
    # and shifts stay f32 regardless of the activation I/O dtype.
    wg_f = (g_scale[:, None] * wg).astype(jnp.float32)          # (F_int, F_g)
    wx_f = (x_scale[:, None] * wx).astype(jnp.float32)          # (F_int, F_l)
    wpsi_f = (p_scale[:, None] * wpsi).T.astype(jnp.float32)    # (F_int, 1)
    shift_f = (g_shift + x_shift)[:, None].astype(jnp.float32)  # (F_int, 1)
    p_shift_f = p_shift.reshape(1, 1).astype(jnp.float32)       # (1, 1)

    if io_dtype is None:
        io_dtype = x.dtype
    io_dtype = jnp.dtype(io_dtype)
    itemsize = io_dtype.itemsize

    # Free reshapes of the native NCHW layout: pixels end up on the lane axis.
    g3 = g.reshape(N, F_g, P).astype(io_dtype)
    x3 = x.reshape(N, F_l, P).astype(io_dtype)

    # Pixel tiling: TP is always a multiple of 128 and bounded by tile_p;
    # P is padded (single extra HBM pass, only when needed) so no masked
    # tail stores and no whole-row fallback tiles.
    TP, P_pad = _choose_pixel_tile(P, tile_p)
    if P_pad != P:
        g3 = jnp.pad(g3, ((0, 0), (0, 0), (0, P_pad - P)))
        x3 = jnp.pad(x3, ((0, 0), (0, 0), (0, P_pad - P)))
    n_ptiles = P_pad // TP

    # Batch blocking for small resolutions: amortize the ~0.35us step
    # overhead by moving several images per grid step.
    per_image_bytes = (F_g + 2 * F_l) * TP * itemsize
    NB = _choose_batch_block(N, per_image_bytes, n_ptiles)
    grid = (N // NB, n_ptiles)

    # VMEM budget: double-buffered I/O blocks + f32 intermediates + slack.
    block_bytes = NB * TP * itemsize * (F_g + 2 * F_l)
    interm_bytes = NB * TP * 4 * (3 * F_int + 1 + F_g + F_l)
    vmem_limit = int(min(max(2 * block_bytes + interm_bytes + (2 << 20),
                             16 << 20), 64 << 20))

    cost = pl.CostEstimate(
        flops=int(2 * N * P * F_int * (F_g + F_l)
                  + N * P * (3 * F_int + F_l + 4)),
        transcendentals=int(N * P),
        bytes_accessed=int(N * P * (F_g + 2 * F_l) * itemsize),
    )

    const = lambda shape: pl.BlockSpec(shape, lambda n, p: (0, 0))

    out3 = pl.pallas_call(
        _attention_gate_kernel,
        out_shape=jax.ShapeDtypeStruct((N, F_l, P_pad), io_dtype),
        grid_spec=pltpu.PrefetchScalarGridSpec(
            num_scalar_prefetch=0,
            grid=grid,
            in_specs=[
                pl.BlockSpec((NB, F_g, TP), lambda n, p: (n, 0, p)),
                pl.BlockSpec((NB, F_l, TP), lambda n, p: (n, 0, p)),
                const((F_int, F_g)),
                const((F_int, F_l)),
                const((F_int, 1)),
                const((F_int, 1)),
                const((1, 1)),
            ],
            out_specs=pl.BlockSpec((NB, F_l, TP), lambda n, p: (n, 0, p)),
        ),
        compiler_params=pltpu.CompilerParams(
            dimension_semantics=("parallel", "parallel"),
            vmem_limit_bytes=vmem_limit),
        cost_estimate=cost,
    )(g3, x3, wg_f, wx_f, wpsi_f, shift_f, p_shift_f)

    if P_pad != P:
        out3 = out3[:, :, :P]
    return out3.reshape(N, F_l, H, W)


def _reference(g, x, params, eps=1e-5):
    """Pure-JAX reference (eval-mode BN) for correctness checking."""
    def conv_bn(inp, w, b, gamma, beta, mean, var):
        y = jnp.einsum("nchw,oc->nohw", inp, w) + b[None, :, None, None]
        y = (y - mean[None, :, None, None]) / jnp.sqrt(var + eps)[None, :, None, None]
        return y * gamma[None, :, None, None] + beta[None, :, None, None]

    g1 = conv_bn(g, params["wg"], params["bg"], params["bn_g_gamma"],
                 params["bn_g_beta"], params["bn_g_mean"], params["bn_g_var"])
    x1 = conv_bn(x, params["wx"], params["bx"], params["bn_x_gamma"],
                 params["bn_x_beta"], params["bn_x_mean"], params["bn_x_var"])
    h = jnp.maximum(g1 + x1, 0.0)
    p = conv_bn(h, params["wpsi"], params["bpsi"], params["bn_p_gamma"],
                params["bn_p_beta"], params["bn_p_mean"], params["bn_p_var"])
    return x * jax.nn.sigmoid(p)


def _make_params(key, F_g, F_l, F_int):
    ks = jax.random.split(key, 16)
    return {
        # Conv2d(F_g, F_int, 1) / Conv2d(F_l, F_int, 1) / Conv2d(F_int, 1, 1)
        "wg": 0.2 * jax.random.normal(ks[0], (F_int, F_g), jnp.float32),
        "bg": 0.1 * jax.random.normal(ks[1], (F_int,), jnp.float32),
        "wx": 0.2 * jax.random.normal(ks[2], (F_int, F_l), jnp.float32),
        "bx": 0.1 * jax.random.normal(ks[3], (F_int,), jnp.float32),
        "wpsi": 0.2 * jax.random.normal(ks[4], (1, F_int), jnp.float32),
        "bpsi": 0.1 * jax.random.normal(ks[5], (1,), jnp.float32),
        # BatchNorm2d(F_int) for W_g / W_x branches, BatchNorm2d(1) for psi.
        "bn_g_gamma": 1.0 + 0.1 * jax.random.normal(ks[6], (F_int,), jnp.float32),
        "bn_g_beta": 0.1 * jax.random.normal(ks[7], (F_int,), jnp.float32),
        "bn_g_mean": 0.05 * jax.random.normal(ks[8], (F_int,), jnp.float32),
        "bn_g_var": jnp.abs(1.0 + 0.1 * jax.random.normal(ks[9], (F_int,), jnp.float32)),
        "bn_x_gamma": 1.0 + 0.1 * jax.random.normal(ks[10], (F_int,), jnp.float32),
        "bn_x_beta": 0.1 * jax.random.normal(ks[11], (F_int,), jnp.float32),
        "bn_x_mean": 0.05 * jax.random.normal(ks[12], (F_int,), jnp.float32),
        "bn_x_var": jnp.abs(1.0 + 0.1 * jax.random.normal(ks[13], (F_int,), jnp.float32)),
        "bn_p_gamma": jnp.array([1.1], jnp.float32),
        "bn_p_beta": jnp.array([0.05], jnp.float32),
        "bn_p_mean": jnp.array([0.02], jnp.float32),
        "bn_p_var": jnp.array([0.9], jnp.float32),
    }


if __name__ == "__main__":
    # Small shapes consistent with the module: F_g = F_l = 8, F_int = 8.
    F_g = F_l = F_int = 8
    key = jax.random.PRNGKey(0)
    kp, kg, kx, kg2, kx2 = jax.random.split(key, 5)
    params = _make_params(kp, F_g, F_l, F_int)

    # --- Case 1: batch=2, 16x16, f32 I/O (tight tolerance). --------------
    g = jax.random.normal(kg, (2, F_g, 16, 16), jnp.float32)
    x = jax.random.normal(kx, (2, F_l, 16, 16), jnp.float32)
    out = jax.jit(functools.partial(attention_gate, tile_p=32768))(g, x, params)
    out = jax.block_until_ready(out)
    ref = _reference(g, x, params)
    assert out.shape == x.shape and out.dtype == x.dtype
    assert jnp.allclose(out, ref, atol=1e-5, rtol=1e-5), float(
        jnp.max(jnp.abs(out - ref)))

    # --- Case 2: same inputs, bf16 activation I/O (looser tolerance). ----
    out_bf = jax.jit(functools.partial(attention_gate, io_dtype=jnp.bfloat16))(
        g, x, params)
    out_bf = jax.block_until_ready(out_bf)
    assert out_bf.dtype == jnp.bfloat16
    assert jnp.allclose(out_bf.astype(jnp.float32), ref, atol=5e-2, rtol=5e-2), \
        float(jnp.max(jnp.abs(out_bf.astype(jnp.float32) - ref)))

    # --- Case 3: batch=4, 15x15 (P=225 -> padded to 256, NB=2 per step). -
    g2 = jax.random.normal(kg2, (4, F_g, 15, 15), jnp.float32)
    x2 = jax.random.normal(kx2, (4, F_l, 15, 15), jnp.float32)
    out2 = jax.jit(attention_gate)(g2, x2, params)
    out2 = jax.block_until_ready(out2)
    ref2 = _reference(g2, x2, params)
    assert out2.shape == x2.shape
    assert jnp.allclose(out2, ref2, atol=1e-5, rtol=1e-5), float(
        jnp.max(jnp.abs(out2 - ref2)))

    print("KERNEL_OK")
</pallas_src>

<mosaic_0001>
module attributes {stable_mosaic.version = 11 : i64} {
  func.func @_attention_gate_kernel(%arg0: i32, %arg1: i32, %arg2: memref<1x8x256xf32, #tpu.memory_space<vmem>>, %arg3: memref<1x8x256xf32, #tpu.memory_space<vmem>>, %arg4: memref<8x8xf32, #tpu.memory_space<vmem>>, %arg5: memref<8x8xf32, #tpu.memory_space<vmem>>, %arg6: memref<8x1xf32, #tpu.memory_space<vmem>>, %arg7: memref<8x1xf32, #tpu.memory_space<vmem>>, %arg8: memref<1x1xf32, #tpu.memory_space<vmem>>, %arg9: memref<1x8x256xf32, #tpu.memory_space<vmem>>) attributes {dimension_semantics = [#tpu.dimension_semantics<parallel>, #tpu.dimension_semantics<parallel>], iteration_bounds = array<i64: 2, 1>, scalar_prefetch = 0 : i64, scratch_operands = 0 : i64, tpu.core_type = #tpu.core_type<tc>, window_params = [{transform_indices = @transform_0, window_bounds = array<i64: 1, 8, 256>}, {transform_indices = @transform_1, window_bounds = array<i64: 1, 8, 256>}, {pipeline_mode = #tpu.pipeline_mode<synchronous>, transform_indices = @transform_2, window_bounds = array<i64: 8, 8>}, {pipeline_mode = #tpu.pipeline_mode<synchronous>, transform_indices = @transform_3, window_bounds = array<i64: 8, 8>}, {pipeline_mode = #tpu.pipeline_mode<synchronous>, transform_indices = @transform_4, window_bounds = array<i64: 8, 1>}, {pipeline_mode = #tpu.pipeline_mode<synchronous>, transform_indices = @transform_5, window_bounds = array<i64: 8, 1>}, {pipeline_mode = #tpu.pipeline_mode<synchronous>, transform_indices = @transform_6, window_bounds = array<i64: 1, 1>}, {transform_indices = @transform_7, window_bounds = array<i64: 1, 8, 256>}]} {
    %c0 = arith.constant 0 : index
    %c0_0 = arith.constant 0 : index
    %0 = vector.load %arg4[%c0, %c0_0] : memref<8x8xf32, #tpu.memory_space<vmem>>, vector<8x8xf32>
    %c0_1 = arith.constant 0 : index
    %c0_2 = arith.constant 0 : index
    %1 = vector.load %arg5[%c0_1, %c0_2] : memref<8x8xf32, #tpu.memory_space<vmem>>, vector<8x8xf32>
    %c0_3 = arith.constant 0 : index
    %c0_4 = arith.constant 0 : index
    %2 = vector.load %arg6[%c0_3, %c0_4] : memref<8x1xf32, #tpu.memory_space<vmem>>, vector<8x1xf32>
    %c0_5 = arith.constant 0 : index
    %c0_6 = arith.constant 0 : index
    %3 = vector.load %arg7[%c0_5, %c0_6] : memref<8x1xf32, #tpu.memory_space<vmem>>, vector<8x1xf32>
    %c0_7 = arith.constant 0 : index
    %c0_8 = arith.constant 0 : index
    %4 = vector.load %arg8[%c0_7, %c0_8] : memref<1x1xf32, #tpu.memory_space<vmem>>, vector<1x1xf32>
    %c0_9 = arith.constant 0 : index
    %c0_10 = arith.constant 0 : index
    %c0_11 = arith.constant 0 : index
    %5 = vector.load %arg2[%c0_9, %c0_10, %c0_11] : memref<1x8x256xf32, #tpu.memory_space<vmem>>, vector<1x8x256xf32>
    %6 = vector.shape_cast %5 : vector<1x8x256xf32> to vector<8x256xf32>
    %c0_12 = arith.constant 0 : index
    %c0_13 = arith.constant 0 : index
    %c0_14 = arith.constant 0 : index
    %7 = vector.load %arg3[%c0_12, %c0_13, %c0_14] : memref<1x8x256xf32, #tpu.memory_space<vmem>>, vector<1x8x256xf32>
    %8 = vector.shape_cast %7 : vector<1x8x256xf32> to vector<8x256xf32>
    %cst = arith.constant dense<0.000000e+00> : vector<8x256xf32>
    %9 = tpu.matmul %0, %6, %cst {dimension_numbers = #tpu.dot_dimension_numbers<[1], [0], [0], [1], [0, 0, 1, 1], [], []>} : vector<8x8xf32>, vector<8x256xf32>, vector<8x256xf32> -> vector<8x256xf32>
    %cst_15 = arith.constant dense<0.000000e+00> : vector<8x256xf32>
    %10 = tpu.matmul %1, %8, %cst_15 {dimension_numbers = #tpu.dot_dimension_numbers<[1], [0], [0], [1], [0, 0, 1, 1], [], []>} : vector<8x8xf32>, vector<8x256xf32>, vector<8x256xf32> -> vector<8x256xf32>
    %11 = arith.addf %9, %10 : vector<8x256xf32>
    %12 = vector.broadcast %3 : vector<8x1xf32> to vector<8x256xf32>
    %13 = arith.addf %11, %12 : vector<8x256xf32>
    %cst_16 = arith.constant 0.000000e+00 : f32
    %14 = vector.broadcast %cst_16 : f32 to vector<8x256xf32>
    %15 = arith.maximumf %13, %14 : vector<8x256xf32>
    %16 = vector.broadcast %2 : vector<8x1xf32> to vector<8x256xf32>
    %17 = arith.mulf %15, %16 : vector<8x256xf32>
    %cst_17 = arith.constant dense<0.000000e+00> : vector<256xf32>
    %18 = vector.multi_reduction <add>, %17, %cst_17 [0] : vector<8x256xf32> to vector<256xf32>
    %19 = vector.shape_cast %18 : vector<256xf32> to vector<1x256xf32>
    %20 = vector.broadcast %4 : vector<1x1xf32> to vector<1x256xf32>
    %21 = arith.addf %19, %20 : vector<1x256xf32>
    %22 = arith.negf %21 : vector<1x256xf32>
    %23 = math.exp %22 : vector<1x256xf32>
    %cst_18 = arith.constant 1.000000e+00 : f32
    %24 = vector.broadcast %cst_18 : f32 to vector<1x256xf32>
    %25 = arith.addf %24, %23 : vector<1x256xf32>
    %26 = arith.divf %24, %25 : vector<1x256xf32>
    %27 = vector.broadcast %26 : vector<1x256xf32> to vector<8x256xf32>
    %28 = arith.mulf %8, %27 : vector<8x256xf32>
    %c0_19 = arith.constant 0 : index
    %c0_20 = arith.constant 0 : index
    %c0_21 = arith.constant 0 : index
    %29 = vector.load %arg9[%c0_19, %c0_20, %c0_21] : memref<1x8x256xf32, #tpu.memory_space<vmem>>, vector<1x8x256xf32>
    %30 = vector.shape_cast %29 : vector<1x8x256xf32> to vector<8x256xf32>
    %31 = vector.shape_cast %28 : vector<8x256xf32> to vector<1x8x256xf32>
    tpu.vector_store %arg9[%c0_19, %c0_20, %c0_21], %31 {strides = array<i32>} : memref<1x8x256xf32, #tpu.memory_space<vmem>>, vector<1x8x256xf32>,
    return
  }
  func.func @transform_0(%arg0: i32, %arg1: i32) -> (i32, i32, i32) {
    %c0_i32 = arith.constant 0 : i32
    %c0_i32_0 = arith.constant 0 : i32
    return %arg0, %c0_i32, %arg1 : i32, i32, i32
  }
  func.func @transform_1(%arg0: i32, %arg1: i32) -> (i32, i32, i32) {
    %c0_i32 = arith.constant 0 : i32
    %c0_i32_0 = arith.constant 0 : i32
    return %arg0, %c0_i32, %arg1 : i32, i32, i32
  }
  func.func @transform_2(%arg0: i32, %arg1: i32) -> (i32, i32) {
    %c0_i32 = arith.constant 0 : i32
    %c0_i32_0 = arith.constant 0 : i32
    %c0_i32_1 = arith.constant 0 : i32
    return %c0_i32, %c0_i32_0 : i32, i32
  }
  func.func @transform_3(%arg0: i32, %arg1: i32) -> (i32, i32) {
    %c0_i32 = arith.constant 0 : i32
    %c0_i32_0 = arith.constant 0 : i32
    %c0_i32_1 = arith.constant 0 : i32
    return %c0_i32, %c0_i32_0 : i32, i32
  }
  func.func @transform_4(%arg0: i32, %arg1: i32) -> (i32, i32) {
    %c0_i32 = arith.constant 0 : i32
    %c0_i32_0 = arith.constant 0 : i32
    %c0_i32_1 = arith.constant 0 : i32
    return %c0_i32, %c0_i32_0 : i32, i32
  }
  func.func @transform_5(%arg0: i32, %arg1: i32) -> (i32, i32) {
    %c0_i32 = arith.constant 0 : i32
    %c0_i32_0 = arith.constant 0 : i32
    %c0_i32_1 = arith.constant 0 : i32
    return %c0_i32, %c0_i32_0 : i32, i32
  }
  func.func @transform_6(%arg0: i32, %arg1: i32) -> (i32, i32) {
    %c0_i32 = arith.constant 0 : i32
    %c0_i32_0 = arith.constant 0 : i32
    %c0_i32_1 = arith.constant 0 : i32
    return %c0_i32, %c0_i32_0 : i32, i32
  }
  func.func @transform_7(%arg0: i32, %arg1: i32) -> (i32, i32, i32) {
    %c0_i32 = arith.constant 0 : i32
    %c0_i32_0 = arith.constant 0 : i32
    return %arg0, %c0_i32, %arg1 : i32, i32, i32
  }
}

</mosaic_0001>

<llo_original>
// kernel: attention_gate.1
$region0: #{attention_gate.1}
  #allocation0 [shape = 'u32[]', space=smem, size = 0x4, offset = 0x4, fixed_abs, tag = 'smem constant byte address 0x4 - core index']
  #allocation1 [shape = 'u32[144,128]{1,0:T(1,128)}', space=vmem, size = 0x12000, scoped, tag = 'internal scratch']
  #allocation2 [shape = 'f32[1,1]{1,0:T(1,128)S(1)}', space=vmem, size = 0x200, scoped, tag = 'scoped memory for attention_gate.1']
  %s0 = inlined_call_operand.vmem [shape: f32[2,8,256], index: 0, kind: input, shape index: {}]
  %s1 = inlined_call_operand.vmem [shape: f32[2,8,256], index: 1, kind: input, shape index: {}]
  %s2 = inlined_call_operand.vmem [shape: f32[8,8], index: 2, kind: input, shape index: {}]
  %s3 = inlined_call_operand.vmem [shape: f32[8,8], index: 3, kind: input, shape index: {}]
  %s4 = inlined_call_operand.vmem [shape: f32[8,1], index: 4, kind: input, shape index: {}]
  %s5 = inlined_call_operand.vmem [shape: f32[8,1], index: 5, kind: input, shape index: {}]
  %s6 = inlined_call_operand.<no memory space> [shape: f32[1,1], index: 6, kind: input, shape index: {}]
  %s7 = inlined_call_operand.vmem [shape: f32[2,8,256], index: 7, kind: output, shape index: {}]
  %s8 = sld [smem:[#allocation0]]
  $region61: #{attention_gate.1} parent=0
    _
  %s10 = ssub.s32 1, %s8
  %s11 = scalar_select 0, %s10, %s8
  %v12 = vstv %s6
  %13 = vst [vmem:[#allocation2] sm:$0x1] %v12
  loop: start=0, step=1, limit=4
  $region2: #{attention_gate.1} parent=0 // loop_pre_header
    _
  $region3: #{attention_gate.1} parent=0 // loop_header
    %s15 = sphi 0, %s19
    %p16 = scmp.ge.s32.totalorder %s15, 4
    %s22 = sphi 0, %s34
    %s23 = sphi 0, %s30
    %s24 = sphi 0, %s22
    %s25 = sphi 0, %s23
    %s26 = sphi 0, %s24
    %s27 = sphi 0, %s25
    %s39 = sphi 0, %s41
    %s42 = sphi 0, %s39
    %s43 = sphi 0, %s42
    %s59 = sphi 0, %s43
    %s67 = sphi 0, %s69
    %s70 = sphi 0, %s67
    %s71 = sphi 0, %s70
    %s87 = sphi 0, %s71
    %s91 = sphi 0, %s91
    %s93 = sphi 0, %s91
    %s94 = sphi 0, %s93
    %s108 = sphi 0, %s94
    %s112 = sphi 0, %s112
    %s114 = sphi 0, %s112
    %s115 = sphi 0, %s114
    %s129 = sphi 0, %s115
    %s133 = sphi 0, %s133
    %s135 = sphi 0, %s133
    %s136 = sphi 0, %s135
    %s150 = sphi 0, %s136
    %s154 = sphi 0, %s154
    %s156 = sphi 0, %s154
    %s157 = sphi 0, %s156
    %s171 = sphi 0, %s157
    %s175 = sphi 0, %s175
    %s177 = sphi 0, %s175
    %s178 = sphi 0, %s177
    %s192 = sphi 0, %s178
    %s200 = sphi 0, %s202
    %s203 = sphi 0, %s200
    %s204 = sphi 0, %s203
    %s220 = sphi 0, %s204
  $region4: #{attention_gate.1} parent=0 // loop_header_branch
    %18 = sbr.rel (%p16) target = $region8
  $region5: #{attention_gate.1} parent=0 // loop_body
    %s20 = ssub.s32 %s15, 1
    %s21 = ssub.s32 %s15, 2
    %s28 = sadd.s32 1, %s23
    %p29 = scmp.ge.s32.totalorder %s28, 1
    %s30 = scalar_select %p29, 0, %s28
    %s31 = sadd.s32 1, %s22
    %s32 = scalar_select %p29, %s31, %s22
    %p33 = scmp.ge.s32.totalorder %s32, 2
    %s34 = scalar_select %p33, 0, %s32
    %s35 = ssub.s32 %s22, %s34
    %s36 = ssub.s32 %s23, %s30
    %s37 = sor.u32 %s35, %s36
    %p38 = scmp.eq.s32.totalorder %s37, 0
    %s40 = sadd.s32 %s39, 1
    %s41 = scalar_select %p38, %s39, %s40
    %p44 = pneg %p38
    %p45 = scmp.eq.s32.totalorder %s15, 1
    %p46 = por %p44, %p45
    %p47 = scmp.ne.s32.totalorder %s39, %s42
    %p48 = scmp.eq.s32.totalorder %s15, 0
    %p49 = por %p47, %p48
    %p50 = scmp.ne.s32.totalorder %s39, %s42
    %p51 = scmp.eq.s32.totalorder %s20, 1
    %p52 = por %p50, %p51
    %p53 = scmp.ne.s32.totalorder %s42, %s43
    %p54 = scmp.eq.s32.totalorder %s20, 0
    %p55 = por %p53, %p54
    %p56 = scmp.ne.s32.totalorder %s42, %s43
    %p57 = scmp.eq.s32.totalorder %s21, 1
    %p58 = por %p56, %p57
    %p60 = scmp.ne.s32.totalorder %s43, %s59
    %p61 = scmp.eq.s32.totalorder %s21, 0
    %p62 = por %p60, %p61
    %s63 = ssub.s32 %s22, %s34
    %s64 = ssub.s32 %s23, %s30
    %s65 = sor.u32 %s63, %s64
    %p66 = scmp.eq.s32.totalorder %s65, 0
    %s68 = sadd.s32 %s67, 1
    %s69 = scalar_select %p66, %s67, %s68
    %p72 = pneg %p66
    %p73 = scmp.eq.s32.totalorder %s15, 1
    %p74 = por %p72, %p73
    %p75 = scmp.ne.s32.totalorder %s67, %s70
    %p76 = scmp.eq.s32.totalorder %s15, 0
    %p77 = por %p75, %p76
    %p78 = scmp.ne.s32.totalorder %s67, %s70
    %p79 = scmp.eq.s32.totalorder %s20, 1
    %p80 = por %p78, %p79
    %p81 = scmp.ne.s32.totalorder %s70, %s71
    %p82 = scmp.eq.s32.totalorder %s20, 0
    %p83 = por %p81, %p82
    %p84 = scmp.ne.s32.totalorder %s70, %s71
    %p85 = scmp.eq.s32.totalorder %s21, 1
    %p86 = por %p84, %p85
    %p88 = scmp.ne.s32.totalorder %s71, %s87
    %p89 = scmp.eq.s32.totalorder %s21, 0
    %p90 = por %p88, %p89
    %s92 = sadd.s32 %s91, 1
    %p95 = scmp.eq.s32.totalorder %s15, 1
    %p96 = scmp.ne.s32.totalorder %s91, %s93
    %p97 = scmp.eq.s32.totalorder %s15, 0
    %p98 = por %p96, %p97
    %p99 = scmp.ne.s32.totalorder %s91, %s93
    %p100 = scmp.eq.s32.totalorder %s20, 1
    %p101 = por %p99, %p100
    %p102 = scmp.ne.s32.totalorder %s93, %s94
    %p103 = scmp.eq.s32.totalorder %s20, 0
    %p104 = por %p102, %p103
    %p105 = scmp.ne.s32.totalorder %s93, %s94
    %p106 = scmp.eq.s32.totalorder %s21, 1
    %p107 = por %p105, %p106
    %p109 = scmp.ne.s32.totalorder %s94, %s108
    %p110 = scmp.eq.s32.totalorder %s21, 0
    %p111 = por %p109, %p110
    %s113 = sadd.s32 %s112, 1
    %p116 = scmp.eq.s32.totalorder %s15, 1
    %p117 = scmp.ne.s32.totalorder %s112, %s114
    %p118 = scmp.eq.s32.totalorder %s15, 0
    %p119 = por %p117, %p118
    %p120 = scmp.ne.s32.totalorder %s112, %s114
    %p121 = scmp.eq.s32.totalorder %s20, 1
    %p122 = por %p120, %p121
    %p123 = scmp.ne.s32.totalorder %s114, %s115
    %p124 = scmp.eq.s32.totalorder %s20, 0
    %p125 = por %p123, %p124
    %p126 = scmp.ne.s32.totalorder %s114, %s115
    %p127 = scmp.eq.s32.totalorder %s21, 1
    %p128 = por %p126, %p127
    %p130 = scmp.ne.s32.totalorder %s115, %s129
    %p131 = scmp.eq.s32.totalorder %s21, 0
    %p132 = por %p130, %p131
    %s134 = sadd.s32 %s133, 1
    %p137 = scmp.eq.s32.totalorder %s15, 1
    %p138 = scmp.ne.s32.totalorder %s133, %s135
    %p139 = scmp.eq.s32.totalorder %s15, 0
    %p140 = por %p138, %p139
    %p141 = scmp.ne.s32.totalorder %s133, %s135
    %p142 = scmp.eq.s32.totalorder %s20, 1
    %p143 = por %p141, %p142
    %p144 = scmp.ne.s32.totalorder %s135, %s136
    %p145 = scmp.eq.s32.totalorder %s20, 0
    %p146 = por %p144, %p145
    %p147 = scmp.ne.s32.totalorder %s135, %s136
    %p148 = scmp.eq.s32.totalorder %s21, 1
    %p149 = por %p147, %p148
    %p151 = scmp.ne.s32.totalorder %s136, %s150
    %p152 = scmp.eq.s32.totalorder %s21, 0
    %p153 = por %p151, %p152
    %s155 = sadd.s32 %s154, 1
    %p158 = scmp.eq.s32.totalorder %s15, 1
    %p159 = scmp.ne.s32.totalorder %s154, %s156
    %p160 = scmp.eq.s32.totalorder %s15, 0
    %p161 = por %p159, %p160
    %p162 = scmp.ne.s32.totalorder %s154, %s156
    %p163 = scmp.eq.s32.totalorder %s20, 1
    %p164 = por %p162, %p163
    %p165 = scmp.ne.s32.totalorder %s156, %s157
    %p166 = scmp.eq.s32.totalorder %s20, 0
    %p167 = por %p165, %p166
    %p168 = scmp.ne.s32.totalorder %s156, %s157
    %p169 = scmp.eq.s32.totalorder %s21, 1
    %p170 = por %p168, %p169
    %p172 = scmp.ne.s32.totalorder %s157, %s171
    %p173 = scmp.eq.s32.totalorder %s21, 0
    %p174 = por %p172, %p173
    %s176 = sadd.s32 %s175, 1
    %p179 = scmp.eq.s32.totalorder %s15, 1
    %p180 = scmp.ne.s32.totalorder %s175, %s177
    %p181 = scmp.eq.s32.totalorder %s15, 0
    %p182 = por %p180, %p181
    %p183 = scmp.ne.s32.totalorder %s175, %s177
    %p184 = scmp.eq.s32.totalorder %s20, 1
    %p185 = por %p183, %p184
    %p186 = scmp.ne.s32.totalorder %s177, %s178
    %p187 = scmp.eq.s32.totalorder %s20, 0
    %p188 = por %p186, %p187
    %p189 = scmp.ne.s32.totalorder %s177, %s178
    %p190 = scmp.eq.s32.totalorder %s21, 1
    %p191 = por %p189, %p190
    %p193 = scmp.ne.s32.totalorder %s178, %s192
    %p194 = scmp.eq.s32.totalorder %s21, 0
    %p195 = por %p193, %p194
    %s196 = ssub.s32 %s22, %s34
    %s197 = ssub.s32 %s23, %s30
    %s198 = sor.u32 %s196, %s197
    %p199 = scmp.eq.s32.totalorder %s198, 0
    %s201 = sadd.s32 %s200, 1
    %s202 = scalar_select %p199, %s200, %s201
    %p205 = pneg %p199
    %p206 = scmp.eq.s32.totalorder %s15, 1
    %p207 = por %p205, %p206
    %p208 = scmp.ne.s32.totalorder %s200, %s203
    %p209 = scmp.eq.s32.totalorder %s15, 0
    %p210 = por %p208, %p209
    %p211 = scmp.ne.s32.totalorder %s200, %s203
    %p212 = scmp.eq.s32.totalorder %s20, 1
    %p213 = por %p211, %p212
    %p214 = scmp.ne.s32.totalorder %s203, %s204
    %p215 = scmp.eq.s32.totalorder %s20, 0
    %p216 = por %p214, %p215
    %p217 = scmp.ne.s32.totalorder %s203, %s204
    %p218 = scmp.eq.s32.totalorder %s21, 1
    %p219 = por %p217, %p218
    %p221 = scmp.ne.s32.totalorder %s204, %s220
    %p222 = scmp.eq.s32.totalorder %s21, 0
    %p223 = por %p221, %p222
    %p224 = scmp.le.s32.totalorder 1, %s15
    %p225 = scmp.lt.s32.totalorder %s15, 3
    %p226 = pnand %p224, %p225
    %p227 = pneg %p226
    // Predicated region
    $region9: #{attention_gate.1} parent=5 // pred_check
      _
    $region10: #{attention_gate.1} parent=5 // pred_check_branch
      %229 = sbr.rel (%p226) target = $region12
    $region11: #{attention_gate.1} parent=5 // pred_region
      %s230 = ssub.s32 %s15, 1
      // Predicated region
      $region13: #{attention_gate.1} parent=11 // pred_check
        %p231 = pneg %p104
      $region14: #{attention_gate.1} parent=11 // pred_check_branch
        %233 = sbr.rel (%p231) target = $region16
      $region15: #{attention_gate.1} parent=11 // pred_region
        _
      $region16: #{attention_gate.1} parent=11 // pred_fallthru
        _
      // Predicated region
      $region17: #{attention_gate.1} parent=11 // pred_check
        %p234 = pneg %p125
      $region18: #{attention_gate.1} parent=11 // pred_check_branch
        %236 = sbr.rel (%p234) target = $region20
      $region19: #{attention_gate.1} parent=11 // pred_region
        _
      $region20: #{attention_gate.1} parent=11 // pred_fallthru
        _
      // Predicated region
      $region21: #{attention_gate.1} parent=11 // pred_check
        %p237 = pneg %p146
      $region22: #{attention_gate.1} parent=11 // pred_check_branch
        %239 = sbr.rel (%p237) target = $region24
      $region23: #{attention_gate.1} parent=11 // pred_region
        _
      $region24: #{attention_gate.1} parent=11 // pred_fallthru
        _
      // Predicated region
      $region25: #{attention_gate.1} parent=11 // pred_check
        %p240 = pneg %p167
      $region26: #{attention_gate.1} parent=11 // pred_check_branch
        %242 = sbr.rel (%p240) target = $region28
      $region27: #{attention_gate.1} parent=11 // pred_region
        _
      $region28: #{attention_gate.1} parent=11 // pred_fallthru
        _
      // Predicated region
      $region29: #{attention_gate.1} parent=11 // pred_check
        %p243 = pneg %p188
      $region30: #{attention_gate.1} parent=11 // pred_check_branch
        %245 = sbr.rel (%p243) target = $region32
      $region31: #{attention_gate.1} parent=11 // pred_region
        _
      $region32: #{attention_gate.1} parent=11 // pred_fallthru
        _
    $region12: #{attention_gate.1} parent=5 // pred_fallthru
      _
    %p246 = scmp.lt.s32.totalorder %s15, 2
    // Predicated region
    $region33: #{attention_gate.1} parent=5 // pred_check
      %p247 = pneg %p246
    $region34: #{attention_gate.1} parent=5 // pred_check_branch
      %249 = sbr.rel (%p247) target = $region36
    $region35: #{attention_gate.1} parent=5 // pred_region
      // Predicated region
      $region37: #{attention_gate.1} parent=35 // pred_check
        %p250 = pneg %p49
      $region38: #{attention_gate.1} parent=35 // pred_check_branch
        %252 = sbr.rel (%p250) target = $region40
      $region39: #{attention_gate.1} parent=35 // pred_region
        %s253 = smul.u32 2, %s23
        %p254 = scmp.lt.s32.totalorder %s22, 1
        %s255 = scalar_select %p254, %s22, 1
        %p256 = scmp.lt.s32.totalorder %s253, 1
        %s257 = scalar_select %p256, %s253, 1
        %s258 = smul.addr %s255, 2
        %s259 = sadd.s32 %s257, %s258
        %s260 = smul.addr %s259, 8
        %s261 = scalar_lea.vmem %s0, %s260
        %s262 = smul.u32 2, %s23
      $region40: #{attention_gate.1} parent=35 // pred_fallthru
        _
      // Predicated region
      $region41: #{attention_gate.1} parent=35 // pred_check
        %p263 = pneg %p77
      $region42: #{attention_gate.1} parent=35 // pred_check_branch
        %265 = sbr.rel (%p263) target = $region44
      $region43: #{attention_gate.1} parent=35 // pred_region
        %s266 = smul.u32 2, %s23
        %p267 = scmp.lt.s32.totalorder %s22, 1
        %s268 = scalar_select %p267, %s22, 1
        %p269 = scmp.lt.s32.totalorder %s266, 1
        %s270 = scalar_select %p269, %s266, 1
        %s271 = smul.addr %s268, 2
        %s272 = sadd.s32 %s270, %s271
        %s273 = smul.addr %s272, 8
        %s274 = scalar_lea.vmem %s1, %s273
        %s275 = smul.u32 2, %s23
      $region44: #{attention_gate.1} parent=35 // pred_fallthru
        _
    $region36: #{attention_gate.1} parent=5 // pred_fallthru
      _
    %p276 = scmp.le.s32.totalorder 1, %s15
    %p277 = scmp.lt.s32.totalorder %s15, 3
    %p278 = pnand %p276, %p277
    %p279 = pneg %p278
    // Predicated region
    $region45: #{attention_gate.1} parent=5 // pred_check
      _
    $region46: #{attention_gate.1} parent=5 // pred_check_branch
      %281 = sbr.rel (%p278) target = $region48
    $region47: #{attention_gate.1} parent=5 // pred_region
      %s282 = ssub.s32 %s15, 1
      %s283 = smul.u32 2, %s25
      %p284 = scmp.lt.s32.totalorder %s24, 1
      %s285 = scalar_select %p284, %s24, 1
      %p286 = scmp.lt.s32.totalorder %s283, 1
      %s287 = scalar_select %p286, %s283, 1
      %s288 = smul.addr %s285, 2
      %s289 = sadd.s32 %s287, %s288
      %s290 = smul.addr %s289, 8
      %s291 = scalar_lea.vmem %s0, %s290
      %p292 = pneg %p55
      %p293 = pneg %p52
      %s294 = smul.u32 2, %s25
      %p295 = scmp.lt.s32.totalorder %s24, 1
      %s296 = scalar_select %p295, %s24, 1
      %p297 = scmp.lt.s32.totalorder %s294, 1
      %s298 = scalar_select %p297, %s294, 1
      %s299 = smul.addr %s296, 2
      %s300 = sadd.s32 %s298, %s299
      %s301 = smul.addr %s300, 8
      %s302 = scalar_lea.vmem %s1, %s301
      %p303 = pneg %p83
      %p304 = pneg %p80
      %p305 = pneg %p104
      %p306 = pneg %p101
      %p307 = pneg %p125
      %p308 = pneg %p122
      %p309 = pneg %p146
      %p310 = pneg %p143
      %p311 = pneg %p167
      %p312 = pneg %p164
      %p313 = pneg %p188
      %p314 = pneg %p185
      %p315 = pneg %p216
      %p316 = pneg %p213
      %s317 = smul.u32 2, %s25
      %p318 = scmp.lt.s32.totalorder %s24, 1
      %s319 = scalar_select %p318, %s24, 1
      %p320 = scmp.lt.s32.totalorder %s317, 1
      %s321 = scalar_select %p320, %s317, 1
      %s322 = smul.addr %s319, 2
      %s323 = sadd.s32 %s321, %s322
      %s324 = smul.addr %s323, 8
      %s325 = scalar_lea.vmem %s7, %s324
      %s326 = smul.u32 2, %s25
      %p327 = scmp.lt.s32.totalorder %s24, 1
      %s328 = scalar_select %p327, %s24, 1
      %p329 = scmp.lt.s32.totalorder %s326, 1
      %s330 = scalar_select %p329, %s326, 1
      %s331 = smul.addr %s328, 2
      %s332 = sadd.s32 %s330, %s331
      %s333 = smul.addr %s332, 8
      %s334 = scalar_lea.vmem %s0, %s333
      %s335 = smul.u32 2, %s25
      %s336 = smul.u32 2, %s25
      %p337 = scmp.lt.s32.totalorder %s24, 1
      %s338 = scalar_select %p337, %s24, 1
      %p339 = scmp.lt.s32.totalorder %s336, 1
      %s340 = scalar_select %p339, %s336, 1
      %s341 = smul.addr %s338, 2
      %s342 = sadd.s32 %s340, %s341
      %s343 = smul.addr %s342, 8
      %s344 = scalar_lea.vmem %s1, %s343
      %s345 = smul.u32 2, %s25
      %s346 = smul.u32 2, %s25
      %p347 = scmp.lt.s32.totalorder %s24, 1
      %s348 = scalar_select %p347, %s24, 1
      %p349 = scmp.lt.s32.totalorder %s346, 1
      %s350 = scalar_select %p349, %s346, 1
      %s351 = smul.addr %s348, 2
      %s352 = sadd.s32 %s350, %s351
      %s353 = smul.addr %s352, 8
      %s354 = scalar_lea.vmem %s7, %s353
      %s355 = smul.u32 2, %s25
      %v356 = vld [vmem:[%s2] sm:$0xff]
      %v357 = vld [vmem:[%s3] sm:$0xff]
      %v358 = vld [vmem:[%s4] sm:$0xff]
      %v359 = vld [vmem:[%s5] sm:$0xff]
      %v360 = vld [vmem:[#allocation2] sm:$0x1]
      %v361 = vld [vmem:[%s334] sm:$0xff]
      %v362 = vld [vmem:[%s334 + $0x8] sm:$0xff]
      %v363 = vld [vmem:[%s344] sm:$0xff]
      %v364 = vld [vmem:[%s344 + $0x8] sm:$0xff]
      %vm365 = vcmask 64512
      %v367 = vsel %vm365, %v357, 0
      %369 = vmatprep.subr.mxu0 %v364
      %370 = vmatpush1.msra.mxu0 %v363
      %371 = vmatprep.subr.mxu0 0.0
      %372 = vmatpush1.msra.mxu0 0.0
      %373 = vmatprep.subr.mxu0 0.0
      %374 = vmatpush1.msra.mxu0 0.0
      %375 = vmatprep.subr.mxu0 0.0
      %376 = vmatpush1.msra.mxu0 0.0
      %377 = vmatprep.subr.mxu0 0.0
      %378 = vmatpush1.msra.mxu0 0.0
      %379 = vmatprep.subr.mxu0 0.0
      %380 = vmatpush1.msra.mxu0 0.0
      %381 = vmatprep.subr.mxu0 0.0
      %382 = vmatpush1.msra.mxu0 0.0
      %383 = vmatprep.subr.mxu0 0.0
      %384 = vmatpush1.msra.mxu0 0.0
      %385 = vmatprep.subr.mxu0 0.0
      %386 = vmatpush1.msra.mxu0 0.0
      %387 = vmatprep.subr.mxu0 0.0
      %388 = vmatpush1.msra.mxu0 0.0
      %389 = vmatprep.subr.mxu0 0.0
      %390 = vmatpush1.msra.mxu0 0.0
      %391 = vmatprep.subr.mxu0 0.0
      %392 = vmatpush1.msra.mxu0 0.0
      %393 = vmatprep.subr.mxu0 0.0
      %394 = vmatpush1.msra.mxu0 0.0
      %395 = vmatprep.subr.mxu0 0.0
      %396 = vmatpush1.msra.mxu0 0.0
      %397 = vmatprep.subr.mxu0 0.0
      %398 = vmatpush1.msra.mxu0 0.0
      %399 = vmatprep.subr.mxu0 0.0
      %400 = vmatpush1.msra.mxu0 0.0
      %401 = vmatprep.subr.mxu0 0.0
      %402 = vmatpush1.msra.mxu0 0.0
      %403 = vmatprep.subr.mxu0 0.0
      %404 = vmatpush1.msra.mxu0 0.0
      %405 = vmatprep.subr.mxu0 0.0
      %406 = vmatpush1.msra.mxu0 0.0
      %407 = vmatprep.subr.mxu0 0.0
      %408 = vmatpush1.msra.mxu0 0.0
      %409 = vmatprep.subr.mxu0 0.0
      %410 = vmatpush1.msra.mxu0 0.0
      %411 = vmatprep.subr.mxu0 0.0
      %412 = vmatpush1.msra.mxu0 0.0
      %413 = vmatprep.subr.mxu0 0.0
      %414 = vmatpush1.msra.mxu0 0.0
      %415 = vmatprep.subr.mxu0 0.0
      %416 = vmatpush1.msra.mxu0 0.0
      %417 = vmatprep.subr.mxu0 0.0
      %418 = vmatpush1.msra.mxu0 0.0
      %419 = vmatprep.subr.mxu0 0.0
      %420 = vmatpush1.msra.mxu0 0.0
      %421 = vmatprep.subr.mxu0 0.0
      %422 = vmatpush1.msra.mxu0 0.0
      %423 = vmatprep.subr.mxu0 0.0
      %424 = vmatpush1.msra.mxu0 0.0
      %425 = vmatprep.subr.mxu0 0.0
      %426 = vmatpush1.msra.mxu0 0.0
      %427 = vmatprep.subr.mxu0 0.0
      %428 = vmatpush1.msra.mxu0 0.0
      %429 = vmatprep.subr.mxu0 0.0
      %430 = vmatpush1.msra.mxu0 0.0
      %431 = vmatprep.subr.mxu0 0.0
      %432 = vmatpush1.msra.mxu0 0.0
      %433 = vmatprep.mubr.f32.mxu0 0.0
      %434 = vmatmul.mubr.f32.gmra.mrb[0].mxu0 %v367
      %v435 = vpop.f32.mrb[0].mxu0
      %v436 = vadd.f32 0.0, %v435
      %v437 = vpop.f32.mrb[0].mxu0
      %v438 = vadd.f32 0.0, %v437
      %439 = vdwg.mxu0
      %v441 = vsel %vm365, %v356, 0
      %443 = vmatprep.subr.mxu0 %v362
      %444 = vmatpush1.msra.mxu0 %v361
      %445 = vmatprep.subr.mxu0 0.0
      %446 = vmatpush1.msra.mxu0 0.0
      %447 = vmatprep.subr.mxu0 0.0
      %448 = vmatpush1.msra.mxu0 0.0
      %449 = vmatprep.subr.mxu0 0.0
      %450 = vmatpush1.msra.mxu0 0.0
      %451 = vmatprep.subr.mxu0 0.0
      %452 = vmatpush1.msra.mxu0 0.0
      %453 = vmatprep.subr.mxu0 0.0
      %454 = vmatpush1.msra.mxu0 0.0
      %455 = vmatprep.subr.mxu0 0.0
      %456 = vmatpush1.msra.mxu0 0.0
      %457 = vmatprep.subr.mxu0 0.0
      %458 = vmatpush1.msra.mxu0 0.0
      %459 = vmatprep.subr.mxu0 0.0
      %460 = vmatpush1.msra.mxu0 0.0
      %461 = vmatprep.subr.mxu0 0.0
      %462 = vmatpush1.msra.mxu0 0.0
      %463 = vmatprep.subr.mxu0 0.0
      %464 = vmatpush1.msra.mxu0 0.0
      %465 = vmatprep.subr.mxu0 0.0
      %466 = vmatpush1.msra.mxu0 0.0
      %467 = vmatprep.subr.mxu0 0.0
      %468 = vmatpush1.msra.mxu0 0.0
      %469 = vmatprep.subr.mxu0 0.0
      %470 = vmatpush1.msra.mxu0 0.0
      %471 = vmatprep.subr.mxu0 0.0
      %472 = vmatpush1.msra.mxu0 0.0
      %473 = vmatprep.subr.mxu0 0.0
      %474 = vmatpush1.msra.mxu0 0.0
      %475 = vmatprep.subr.mxu0 0.0
      %476 = vmatpush1.msra.mxu0 0.0
      %477 = vmatprep.subr.mxu0 0.0
      %478 = vmatpush1.msra.mxu0 0.0
      %479 = vmatprep.subr.mxu0 0.0
      %480 = vmatpush1.msra.mxu0 0.0
      %481 = vmatprep.subr.mxu0 0.0
      %482 = vmatpush1.msra.mxu0 0.0
      %483 = vmatprep.subr.mxu0 0.0
      %484 = vmatpush1.msra.mxu0 0.0
      %485 = vmatprep.subr.mxu0 0.0
      %486 = vmatpush1.msra.mxu0 0.0
      %487 = vmatprep.subr.mxu0 0.0
      %488 = vmatpush1.msra.mxu0 0.0
      %489 = vmatprep.subr.mxu0 0.0
      %490 = vmatpush1.msra.mxu0 0.0
      %491 = vmatprep.subr.mxu0 0.0
      %492 = vmatpush1.msra.mxu0 0.0
      %493 = vmatprep.subr.mxu0 0.0
      %494 = vmatpush1.msra.mxu0 0.0
      %495 = vmatprep.subr.mxu0 0.0
      %496 = vmatpush1.msra.mxu0 0.0
      %497 = vmatprep.subr.mxu0 0.0
      %498 = vmatpush1.msra.mxu0 0.0
      %499 = vmatprep.subr.mxu0 0.0
      %500 = vmatpush1.msra.mxu0 0.0
      %501 = vmatprep.subr.mxu0 0.0
      %502 = vmatpush1.msra.mxu0 0.0
      %503 = vmatprep.subr.mxu0 0.0
      %504 = vmatpush1.msra.mxu0 0.0
      %505 = vmatprep.subr.mxu0 0.0
      %506 = vmatpush1.msra.mxu0 0.0
      %507 = vmatprep.mubr.f32.mxu0 0.0
      %508 = vmatmul.mubr.f32.gmra.mrb[0].mxu0 %v441
      %v509 = vpop.f32.mrb[0].mxu0
      %v510 = vadd.f32 %v436, %v509
      %v511 = vpop.f32.mrb[0].mxu0
      %v512 = vadd.f32 %v438, %v511
      %513 = vdwg.mxu0
      %515 = vset.pattern.permute.xlu0 0
      %516 = vperm.xlu0 %515, %v359
      %v517 = vpop.permute.xlu0 %516
      %v519 = vadd.f32 %v510, %v517
      %v520 = vadd.f32 %v512, %v517
      %v521 = vmax.f32 %v519, 0.0
      %v522 = vmax.f32 %v520, 0.0
      %524 = vset.pattern.permute.xlu0 0
      %525 = vperm.xlu0 %524, %v358
      %v526 = vpop.permute.xlu0 %525
      %v528 = vmul.f32 %v521, %v526
      %v529 = vmul.f32 %v522, %v526
      %v530 = vrot.slane %v528, 4
      %v531 = vadd.f32 %v528, %v530
      %v532 = vrot.slane %v531, 2
      %v533 = vadd.f32 %v531, %v532
      %v534 = vrot.slane %v533, 1
      %v535 = vadd.f32 %v533, %v534
      %v536 = vrot.slane %v529, 4
      %v537 = vadd.f32 %v529, %v536
      %v538 = vrot.slane %v537, 2
      %v539 = vadd.f32 %v537, %v538
      %v540 = vrot.slane %v539, 1
      %v541 = vadd.f32 %v539, %v540
      %543 = vset.pattern.permute.xlu0 0
      %544 = vperm.xlu0 %543, %v360
      %v545 = vpop.permute.xlu0 %544
      %v547 = vlaneseq
      %v548 = vshrl.u32 %v547, 7
      %v549 = vsub.s32 0, %v548
      %v550 = vrot.slane %v545, %v549
      %v551 = vadd.f32 %v535, %v550
      %v552 = vadd.f32 %v541, %v550
      %v553 = vxor.u32 %v551, 2147483648
      %v554 = vxor.u32 %v552, 2147483648
      %v555 = vmul.f32 %v553, 1.442695
      %v556 = vpow.pop %v555
      %v557 = vmul.f32 %v554, 1.442695
      %v558 = vpow.pop %v557
      %v559 = vadd.f32 %v556, 1.0
      %v560 = vadd.f32 %v558, 1.0
      %v561 = vrcp.pop %v559
      %v562 = vmul.f32 1.0, %v561
      %v563 = vrcp.pop %v560
      %v564 = vmul.f32 1.0, %v563
      %v565 = vmul.f32 %v363, %v562
      %v566 = vmul.f32 %v364, %v564
      %567 = vst [vmem:[%s354] sm:$0xff] %v565
      %568 = vst [vmem:[%s354 + $0x8] sm:$0xff] %v566
      %s569 = smul.u32 2, %s25
      %p570 = scmp.lt.s32.totalorder %s24, 1
      %s571 = scalar_select %p570, %s24, 1
      %p572 = scmp.lt.s32.totalorder %s569, 1
      %s573 = scalar_select %p572, %s569, 1
      %s574 = smul.addr %s571, 2
      %s575 = sadd.s32 %s573, %s574
      %s576 = smul.addr %s575, 8
      %s577 = scalar_lea.vmem %s7, %s576
      // Predicated region
      $region49: #{attention_gate.1} parent=47 // pred_check
        %p578 = pneg %p213
      $region50: #{attention_gate.1} parent=47 // pred_check_branch
        %580 = sbr.rel (%p578) target = $region52
      $region51: #{attention_gate.1} parent=47 // pred_region
        %s581 = smul.u32 2, %s25
      $region52: #{attention_gate.1} parent=47 // pred_fallthru
        _
    $region48: #{attention_gate.1} parent=5 // pred_fallthru
      _
    %p582 = scmp.le.s32.totalorder 2, %s15
    // Predicated region
    $region53: #{attention_gate.1} parent=5 // pred_check
      %p583 = pneg %p582
    $region54: #{attention_gate.1} parent=5 // pred_check_branch
      %585 = sbr.rel (%p583) target = $region56
    $region55: #{attention_gate.1} parent=5 // pred_region
      %s586 = ssub.s32 %s15, 2
      // Predicated region
      $region57: #{attention_gate.1} parent=55 // pred_check
        %p587 = pneg %p219
      $region58: #{attention_gate.1} parent=55 // pred_check_branch
        %589 = sbr.rel (%p587) target = $region60
      $region59: #{attention_gate.1} parent=55 // pred_region
        %s590 = smul.u32 2, %s27
        %p591 = scmp.lt.s32.totalorder %s26, 1
        %s592 = scalar_select %p591, %s26, 1
        %p593 = scmp.lt.s32.totalorder %s590, 1
        %s594 = scalar_select %p593, %s590, 1
        %s595 = smul.addr %s592, 2
        %s596 = sadd.s32 %s594, %s595
        %s597 = smul.addr %s596, 8
        %s598 = scalar_lea.vmem %s7, %s597
      $region60: #{attention_gate.1} parent=55 // pred_fallthru
        _
    $region56: #{attention_gate.1} parent=5 // pred_fallthru
      _
  $region6: #{attention_gate.1} parent=0 // loop_footer
    %s19 = sadd.s32 1, %s15
  $region7: #{attention_gate.1} parent=0 // loop_footer_branch
    %14 = sbr.rel target = $region3
  $region8: #{attention_gate.1} parent=0 // loop_exit
    _

</llo_original>
